<compile_context>
chip_gen: v7x
topology: tpu7x:2x2x1
jax: 0.10.0
libtpu: 0.0.40
codegen_flags: <defaults>
</compile_context>

<pallas_src>
import jax
import jax.numpy as jnp
from jax.experimental import pallas as pl
from jax.experimental.pallas import tpu as pltpu

LN_EPS = 1e-5  # PyTorch nn.LayerNorm default


def _layernorm(h, gamma, beta):
    mean = jnp.mean(h, axis=-1, keepdims=True)
    var = jnp.mean((h - mean) * (h - mean), axis=-1, keepdims=True)
    return (h - mean) * jax.lax.rsqrt(var + LN_EPS) * gamma + beta


def critic_kernel(x_ref, a_ref, w1_ref, w2x_ref, w2a_ref, pp_ref, out_ref):
    # x_ref: (TILE_B, Nin), a_ref: (TILE_B, A) -- streamed batch tiles.
    # w*_ref: bf16 weights (resident).  pp_ref: (8, H) packed f32 small params.
    x = x_ref[...].astype(jnp.bfloat16)
    a = a_ref[...].astype(jnp.bfloat16)

    pp = pp_ref[...]                       # (8, H) f32
    b1, g1, be1 = pp[0:1, :], pp[1:2, :], pp[2:3, :]
    b2, g2, be2 = pp[3:4, :], pp[4:5, :], pp[5:6, :]
    vw = pp[6:7, :]                        # (1, H) value-head weight row
    vb = pp[7:8, 0:1]                      # (1, 1) value-head bias

    # ---- linear1 + ln1 + relu (bf16 MXU, f32 accumulate, f32 LN) -------------
    h = jnp.dot(x, w1_ref[...], preferred_element_type=jnp.float32) + b1
    h = jnp.maximum(_layernorm(h, g1, be1), 0.0)

    # ---- linear2 over concat(h, a), folded into two matmuls ------------------
    h2 = (
        jnp.dot(h.astype(jnp.bfloat16), w2x_ref[...],
                preferred_element_type=jnp.float32)
        + jnp.dot(a, w2a_ref[...], preferred_element_type=jnp.float32)
        + b2
    )
    h2 = jnp.maximum(_layernorm(h2, g2, be2), 0.0)

    # ---- value head: contract H, batch lands on the lane axis ----------------
    #   (1, H) . (TILE_B, H)^T  ->  (1, TILE_B)   (lane-dense output store)
    v = jax.lax.dot_general(
        vw, h2,
        dimension_numbers=(((1,), (1,)), ((), ())),
        preferred_element_type=jnp.float32,
    ) + vb                                  # (1, TILE_B)
    out_ref[...] = v[None].astype(out_ref.dtype)   # (1, 1, TILE_B)


def _round_up(x, m):
    return ((x + m - 1) // m) * m


def critic_forward(inputs, actions, params, *, max_tile_b=1024):
    """inputs: (B, num_inputs) f32, actions: (B, num_actions) f32 -> (B, 1) f32."""
    B, n_in = inputs.shape
    n_act = actions.shape[1]
    H = params["w1_bf16"].shape[1]

    tile_b = max_tile_b if B >= max_tile_b else _round_up(B, 128)
    b_pad = _round_up(B, tile_b)
    num_tiles = b_pad // tile_b

    if b_pad != B:  # pad batch so it divides evenly into tiles
        inputs = jnp.pad(inputs, ((0, b_pad - B), (0, 0)))
        actions = jnp.pad(actions, ((0, b_pad - B), (0, 0)))

    grid_spec = pltpu.PrefetchScalarGridSpec(
        num_scalar_prefetch=0,
        grid=(num_tiles,),
        in_specs=[
            pl.BlockSpec((tile_b, n_in), lambda i: (i, 0)),    # x tile (streamed)
            pl.BlockSpec((tile_b, n_act), lambda i: (i, 0)),   # a tile (streamed)
            pl.BlockSpec((n_in, H), lambda i: (0, 0)),         # W1 (resident)
            pl.BlockSpec((H, H), lambda i: (0, 0)),            # W2 hidden part
            pl.BlockSpec((n_act, H), lambda i: (0, 0)),        # W2 action part
            pl.BlockSpec((8, H), lambda i: (0, 0)),            # packed small params
        ],
        out_specs=pl.BlockSpec((1, 1, tile_b), lambda i: (i, 0, 0)),
    )

    out = pl.pallas_call(
        critic_kernel,
        out_shape=jax.ShapeDtypeStruct((num_tiles, 1, tile_b), jnp.float32),
        grid_spec=grid_spec,
        compiler_params=pltpu.CompilerParams(
            dimension_semantics=("parallel",),      # megacore split on v7x
            vmem_limit_bytes=32 * 1024 * 1024,      # safe on v5e/v6e/v7x
        ),
    )(inputs, actions, params["w1_bf16"], params["w2x_bf16"],
      params["w2a_bf16"], params["packed"])

    # (num_tiles, 1, tile_b) -> (b_pad, 1) -> strip padding
    return out.reshape(b_pad, 1)[:B]


def init_critic_params(key, num_inputs, hidden_size, num_actions):
    """Deterministic init mirroring nn.Linear default (uniform +/- 1/sqrt(fan_in)),
    nn.LayerNorm default (gamma=1, beta=0), and the V *= 0.1 scaling."""
    ks = jax.random.split(key, 6)

    def lin(kw, kb, fan_in, fan_out):
        bound = 1.0 / jnp.sqrt(fan_in)
        w = jax.random.uniform(kw, (fan_out, fan_in), jnp.float32, -bound, bound)
        b = jax.random.uniform(kb, (fan_out,), jnp.float32, -bound, bound)
        return w, b

    H = hidden_size
    w1, b1 = lin(ks[0], ks[1], num_inputs, H)                 # (H, Nin)
    w2, b2 = lin(ks[2], ks[3], H + num_actions, H)            # (H, H+A)
    vw, vb = lin(ks[4], ks[5], H, 1)                          # (1, H), (1,)
    vw = vw * 0.1
    vb = vb * 0.1

    w1_t = jnp.transpose(w1)            # (Nin, H)
    w2x_t = jnp.transpose(w2[:, :H])    # (H, H)  acts on the hidden part
    w2a_t = jnp.transpose(w2[:, H:])    # (A, H)  acts on the action part

    packed = jnp.stack(
        [
            b1,                                   # 0: bias1
            jnp.ones((H,), jnp.float32),          # 1: ln1 gamma
            jnp.zeros((H,), jnp.float32),         # 2: ln1 beta
            b2,                                   # 3: bias2
            jnp.ones((H,), jnp.float32),          # 4: ln2 gamma
            jnp.zeros((H,), jnp.float32),         # 5: ln2 beta
            vw[0],                                # 6: value-head weight row
            jnp.full((H,), vb[0], jnp.float32),   # 7: value-head bias (broadcast)
        ],
        axis=0,
    )                                             # (8, H) f32

    return {
        # kernel operands
        "w1_bf16": w1_t.astype(jnp.bfloat16),
        "w2x_bf16": w2x_t.astype(jnp.bfloat16),
        "w2a_bf16": w2a_t.astype(jnp.bfloat16),
        "packed": packed,
        # f32 copies for the pure-f32 reference
        "w1_t": w1_t, "b1": b1,
        "w2x_t": w2x_t, "w2a_t": w2a_t, "b2": b2,
        "vw_t": jnp.transpose(vw), "vb": vb,
    }


def critic_reference_matched(inputs, actions, params):
    """Pure-JAX reference replicating the kernel's bf16-matmul / f32-LN mix."""
    pp = params["packed"]
    h = jnp.dot(inputs.astype(jnp.bfloat16), params["w1_bf16"],
                preferred_element_type=jnp.float32) + pp[0:1]
    h = jnp.maximum(_layernorm(h, pp[1:2], pp[2:3]), 0.0)
    h2 = (
        jnp.dot(h.astype(jnp.bfloat16), params["w2x_bf16"],
                preferred_element_type=jnp.float32)
        + jnp.dot(actions.astype(jnp.bfloat16), params["w2a_bf16"],
                  preferred_element_type=jnp.float32)
        + pp[3:4]
    )
    h2 = jnp.maximum(_layernorm(h2, pp[4:5], pp[5:6]), 0.0)
    return h2 @ jnp.transpose(pp[6:7]) + pp[7, 0]


def critic_reference_f32(inputs, actions, params):
    """Pure-f32 reference matching the PyTorch module exactly."""
    h = inputs @ params["w1_t"] + params["b1"]
    h = jnp.maximum(_layernorm(h, 1.0, 0.0), 0.0)
    h2 = h @ params["w2x_t"] + actions @ params["w2a_t"] + params["b2"]
    h2 = jnp.maximum(_layernorm(h2, 1.0, 0.0), 0.0)
    return h2 @ params["vw_t"] + params["vb"]


if __name__ == "__main__":
    B, NUM_INPUTS, HIDDEN, NUM_ACTIONS = 8, 16, 32, 4

    key = jax.random.PRNGKey(0)
    k_params, k_x, k_a = jax.random.split(key, 3)

    params = init_critic_params(k_params, NUM_INPUTS, HIDDEN, NUM_ACTIONS)
    inputs = jax.random.normal(k_x, (B, NUM_INPUTS), jnp.float32)
    actions = jax.random.normal(k_a, (B, NUM_ACTIONS), jnp.float32)

    v = jax.block_until_ready(critic_forward(inputs, actions, params))
    assert v.shape == (B, 1)

    # 1) precision-matched reference (same bf16 casts) -> tight tolerance
    v_matched = critic_reference_matched(inputs, actions, params)
    assert jnp.allclose(v, v_matched, atol=2e-4, rtol=2e-4), (v, v_matched)

    # 2) pure-f32 PyTorch-equivalent reference -> loose tolerance (bf16 matmuls)
    v_f32 = critic_reference_f32(inputs, actions, params)
    assert jnp.allclose(v, v_f32, atol=5e-2, rtol=5e-2), (v, v_f32)

    print("KERNEL_OK")
</pallas_src>

<mosaic_0001>
module attributes {stable_mosaic.version = 11 : i64} {
  func.func @critic_kernel(%arg0: i32, %arg1: memref<128x16xf32, #tpu.memory_space<vmem>>, %arg2: memref<128x4xf32, #tpu.memory_space<vmem>>, %arg3: memref<16x32xbf16, #tpu.memory_space<vmem>>, %arg4: memref<32x32xbf16, #tpu.memory_space<vmem>>, %arg5: memref<4x32xbf16, #tpu.memory_space<vmem>>, %arg6: memref<8x32xf32, #tpu.memory_space<vmem>>, %arg7: memref<1x1x128xf32, #tpu.memory_space<vmem>>) attributes {dimension_semantics = [#tpu.dimension_semantics<parallel>], iteration_bounds = array<i64: 1>, scalar_prefetch = 0 : i64, scratch_operands = 0 : i64, tpu.core_type = #tpu.core_type<tc>, window_params = [{transform_indices = @transform_0, window_bounds = array<i64: 128, 16>}, {transform_indices = @transform_1, window_bounds = array<i64: 128, 4>}, {pipeline_mode = #tpu.pipeline_mode<synchronous>, transform_indices = @transform_2, window_bounds = array<i64: 16, 32>}, {pipeline_mode = #tpu.pipeline_mode<synchronous>, transform_indices = @transform_3, window_bounds = array<i64: 32, 32>}, {pipeline_mode = #tpu.pipeline_mode<synchronous>, transform_indices = @transform_4, window_bounds = array<i64: 4, 32>}, {pipeline_mode = #tpu.pipeline_mode<synchronous>, transform_indices = @transform_5, window_bounds = array<i64: 8, 32>}, {transform_indices = @transform_6, window_bounds = array<i64: 1, 1, 128>}]} {
    %c0 = arith.constant 0 : index
    %c0_0 = arith.constant 0 : index
    %0 = vector.load %arg1[%c0, %c0_0] : memref<128x16xf32, #tpu.memory_space<vmem>>, vector<128x16xf32>
    %1 = arith.truncf %0 : vector<128x16xf32> to vector<128x16xbf16>
    %c0_1 = arith.constant 0 : index
    %c0_2 = arith.constant 0 : index
    %2 = vector.load %arg2[%c0_1, %c0_2] : memref<128x4xf32, #tpu.memory_space<vmem>>, vector<128x4xf32>
    %3 = arith.truncf %2 : vector<128x4xf32> to vector<128x4xbf16>
    %c0_3 = arith.constant 0 : index
    %c0_4 = arith.constant 0 : index
    %4 = vector.load %arg6[%c0_3, %c0_4] : memref<8x32xf32, #tpu.memory_space<vmem>>, vector<8x32xf32>
    %5 = vector.extract_strided_slice %4 {offsets = [0, 0], sizes = [1, 32], strides = [1, 1]} : vector<8x32xf32> to vector<1x32xf32>
    %6 = vector.extract_strided_slice %4 {offsets = [1, 0], sizes = [1, 32], strides = [1, 1]} : vector<8x32xf32> to vector<1x32xf32>
    %7 = vector.extract_strided_slice %4 {offsets = [2, 0], sizes = [1, 32], strides = [1, 1]} : vector<8x32xf32> to vector<1x32xf32>
    %8 = vector.extract_strided_slice %4 {offsets = [3, 0], sizes = [1, 32], strides = [1, 1]} : vector<8x32xf32> to vector<1x32xf32>
    %9 = vector.extract_strided_slice %4 {offsets = [4, 0], sizes = [1, 32], strides = [1, 1]} : vector<8x32xf32> to vector<1x32xf32>
    %10 = vector.extract_strided_slice %4 {offsets = [5, 0], sizes = [1, 32], strides = [1, 1]} : vector<8x32xf32> to vector<1x32xf32>
    %11 = vector.extract_strided_slice %4 {offsets = [6, 0], sizes = [1, 32], strides = [1, 1]} : vector<8x32xf32> to vector<1x32xf32>
    %12 = vector.extract_strided_slice %4 {offsets = [7, 0], sizes = [1, 1], strides = [1, 1]} : vector<8x32xf32> to vector<1x1xf32>
    %c0_5 = arith.constant 0 : index
    %c0_6 = arith.constant 0 : index
    %13 = vector.load %arg3[%c0_5, %c0_6] : memref<16x32xbf16, #tpu.memory_space<vmem>>, vector<16x32xbf16>
    %cst = arith.constant dense<0.000000e+00> : vector<128x32xf32>
    %14 = tpu.matmul %1, %13, %cst {dimension_numbers = #tpu.dot_dimension_numbers<[1], [0], [0], [1], [0, 0, 1, 1], [], []>} : vector<128x16xbf16>, vector<16x32xbf16>, vector<128x32xf32> -> vector<128x32xf32>
    %15 = vector.broadcast %5 : vector<1x32xf32> to vector<128x32xf32>
    %16 = arith.addf %14, %15 : vector<128x32xf32>
    %cst_7 = arith.constant dense<0.000000e+00> : vector<128xf32>
    %17 = vector.multi_reduction <add>, %16, %cst_7 [1] : vector<128x32xf32> to vector<128xf32>
    %18 = vector.shape_cast %17 : vector<128xf32> to vector<128x1xf32>
    %cst_8 = arith.constant 3.200000e+01 : f32
    %19 = vector.broadcast %cst_8 : f32 to vector<128x1xf32>
    %20 = arith.divf %18, %19 : vector<128x1xf32>
    %21 = vector.broadcast %20 : vector<128x1xf32> to vector<128x32xf32>
    %22 = arith.subf %16, %21 : vector<128x32xf32>
    %23 = vector.broadcast %20 : vector<128x1xf32> to vector<128x32xf32>
    %24 = arith.subf %16, %23 : vector<128x32xf32>
    %25 = arith.mulf %22, %24 : vector<128x32xf32>
    %cst_9 = arith.constant dense<0.000000e+00> : vector<128xf32>
    %26 = vector.multi_reduction <add>, %25, %cst_9 [1] : vector<128x32xf32> to vector<128xf32>
    %27 = vector.shape_cast %26 : vector<128xf32> to vector<128x1xf32>
    %cst_10 = arith.constant 3.200000e+01 : f32
    %28 = vector.broadcast %cst_10 : f32 to vector<128x1xf32>
    %29 = arith.divf %27, %28 : vector<128x1xf32>
    %30 = vector.broadcast %20 : vector<128x1xf32> to vector<128x32xf32>
    %31 = arith.subf %16, %30 : vector<128x32xf32>
    %cst_11 = arith.constant 9.99999974E-6 : f32
    %32 = vector.broadcast %cst_11 : f32 to vector<128x1xf32>
    %33 = arith.addf %29, %32 : vector<128x1xf32>
    %34 = math.rsqrt %33 : vector<128x1xf32>
    %35 = vector.broadcast %34 : vector<128x1xf32> to vector<128x32xf32>
    %36 = arith.mulf %31, %35 : vector<128x32xf32>
    %37 = vector.broadcast %6 : vector<1x32xf32> to vector<128x32xf32>
    %38 = arith.mulf %36, %37 : vector<128x32xf32>
    %39 = vector.broadcast %7 : vector<1x32xf32> to vector<128x32xf32>
    %40 = arith.addf %38, %39 : vector<128x32xf32>
    %cst_12 = arith.constant 0.000000e+00 : f32
    %41 = vector.broadcast %cst_12 : f32 to vector<128x32xf32>
    %42 = arith.maximumf %40, %41 : vector<128x32xf32>
    %43 = arith.truncf %42 : vector<128x32xf32> to vector<128x32xbf16>
    %c0_13 = arith.constant 0 : index
    %c0_14 = arith.constant 0 : index
    %44 = vector.load %arg4[%c0_13, %c0_14] : memref<32x32xbf16, #tpu.memory_space<vmem>>, vector<32x32xbf16>
    %cst_15 = arith.constant dense<0.000000e+00> : vector<128x32xf32>
    %45 = tpu.matmul %43, %44, %cst_15 {dimension_numbers = #tpu.dot_dimension_numbers<[1], [0], [0], [1], [0, 0, 1, 1], [], []>} : vector<128x32xbf16>, vector<32x32xbf16>, vector<128x32xf32> -> vector<128x32xf32>
    %c0_16 = arith.constant 0 : index
    %c0_17 = arith.constant 0 : index
    %46 = vector.load %arg5[%c0_16, %c0_17] : memref<4x32xbf16, #tpu.memory_space<vmem>>, vector<4x32xbf16>
    %cst_18 = arith.constant dense<0.000000e+00> : vector<128x32xf32>
    %47 = tpu.matmul %3, %46, %cst_18 {dimension_numbers = #tpu.dot_dimension_numbers<[1], [0], [0], [1], [0, 0, 1, 1], [], []>} : vector<128x4xbf16>, vector<4x32xbf16>, vector<128x32xf32> -> vector<128x32xf32>
    %48 = arith.addf %45, %47 : vector<128x32xf32>
    %49 = vector.broadcast %8 : vector<1x32xf32> to vector<128x32xf32>
    %50 = arith.addf %48, %49 : vector<128x32xf32>
    %cst_19 = arith.constant dense<0.000000e+00> : vector<128xf32>
    %51 = vector.multi_reduction <add>, %50, %cst_19 [1] : vector<128x32xf32> to vector<128xf32>
    %52 = vector.shape_cast %51 : vector<128xf32> to vector<128x1xf32>
    %cst_20 = arith.constant 3.200000e+01 : f32
    %53 = vector.broadcast %cst_20 : f32 to vector<128x1xf32>
    %54 = arith.divf %52, %53 : vector<128x1xf32>
    %55 = vector.broadcast %54 : vector<128x1xf32> to vector<128x32xf32>
    %56 = arith.subf %50, %55 : vector<128x32xf32>
    %57 = vector.broadcast %54 : vector<128x1xf32> to vector<128x32xf32>
    %58 = arith.subf %50, %57 : vector<128x32xf32>
    %59 = arith.mulf %56, %58 : vector<128x32xf32>
    %cst_21 = arith.constant dense<0.000000e+00> : vector<128xf32>
    %60 = vector.multi_reduction <add>, %59, %cst_21 [1] : vector<128x32xf32> to vector<128xf32>
    %61 = vector.shape_cast %60 : vector<128xf32> to vector<128x1xf32>
    %cst_22 = arith.constant 3.200000e+01 : f32
    %62 = vector.broadcast %cst_22 : f32 to vector<128x1xf32>
    %63 = arith.divf %61, %62 : vector<128x1xf32>
    %64 = vector.broadcast %54 : vector<128x1xf32> to vector<128x32xf32>
    %65 = arith.subf %50, %64 : vector<128x32xf32>
    %cst_23 = arith.constant 9.99999974E-6 : f32
    %66 = vector.broadcast %cst_23 : f32 to vector<128x1xf32>
    %67 = arith.addf %63, %66 : vector<128x1xf32>
    %68 = math.rsqrt %67 : vector<128x1xf32>
    %69 = vector.broadcast %68 : vector<128x1xf32> to vector<128x32xf32>
    %70 = arith.mulf %65, %69 : vector<128x32xf32>
    %71 = vector.broadcast %9 : vector<1x32xf32> to vector<128x32xf32>
    %72 = arith.mulf %70, %71 : vector<128x32xf32>
    %73 = vector.broadcast %10 : vector<1x32xf32> to vector<128x32xf32>
    %74 = arith.addf %72, %73 : vector<128x32xf32>
    %cst_24 = arith.constant 0.000000e+00 : f32
    %75 = vector.broadcast %cst_24 : f32 to vector<128x32xf32>
    %76 = arith.maximumf %74, %75 : vector<128x32xf32>
    %cst_25 = arith.constant dense<0.000000e+00> : vector<1x128xf32>
    %77 = tpu.matmul %11, %76, %cst_25 {dimension_numbers = #tpu.dot_dimension_numbers<[1], [1], [0], [0], [0, 0, 1, 0], [], []>} : vector<1x32xf32>, vector<128x32xf32>, vector<1x128xf32> -> vector<1x128xf32>
    %78 = vector.broadcast %12 : vector<1x1xf32> to vector<1x128xf32>
    %79 = arith.addf %77, %78 : vector<1x128xf32>
    %80 = vector.shape_cast %79 : vector<1x128xf32> to vector<1x1x128xf32>
    %c0_26 = arith.constant 0 : index
    %c0_27 = arith.constant 0 : index
    %c0_28 = arith.constant 0 : index
    %81 = vector.load %arg7[%c0_26, %c0_27, %c0_28] : memref<1x1x128xf32, #tpu.memory_space<vmem>>, vector<1x1x128xf32>
    tpu.vector_store %arg7[%c0_26, %c0_27, %c0_28], %80 {strides = array<i32>} : memref<1x1x128xf32, #tpu.memory_space<vmem>>, vector<1x1x128xf32>,
    return
  }
  func.func @transform_0(%arg0: i32) -> (i32, i32) {
    %c0_i32 = arith.constant 0 : i32
    %c0_i32_0 = arith.constant 0 : i32
    return %arg0, %c0_i32 : i32, i32
  }
  func.func @transform_1(%arg0: i32) -> (i32, i32) {
    %c0_i32 = arith.constant 0 : i32
    %c0_i32_0 = arith.constant 0 : i32
    return %arg0, %c0_i32 : i32, i32
  }
  func.func @transform_2(%arg0: i32) -> (i32, i32) {
    %c0_i32 = arith.constant 0 : i32
    %c0_i32_0 = arith.constant 0 : i32
    %c0_i32_1 = arith.constant 0 : i32
    return %c0_i32, %c0_i32_0 : i32, i32
  }
  func.func @transform_3(%arg0: i32) -> (i32, i32) {
    %c0_i32 = arith.constant 0 : i32
    %c0_i32_0 = arith.constant 0 : i32
    %c0_i32_1 = arith.constant 0 : i32
    return %c0_i32, %c0_i32_0 : i32, i32
  }
  func.func @transform_4(%arg0: i32) -> (i32, i32) {
    %c0_i32 = arith.constant 0 : i32
    %c0_i32_0 = arith.constant 0 : i32
    %c0_i32_1 = arith.constant 0 : i32
    return %c0_i32, %c0_i32_0 : i32, i32
  }
  func.func @transform_5(%arg0: i32) -> (i32, i32) {
    %c0_i32 = arith.constant 0 : i32
    %c0_i32_0 = arith.constant 0 : i32
    %c0_i32_1 = arith.constant 0 : i32
    return %c0_i32, %c0_i32_0 : i32, i32
  }
  func.func @transform_6(%arg0: i32) -> (i32, i32, i32) {
    %c0_i32 = arith.constant 0 : i32
    %c0_i32_0 = arith.constant 0 : i32
    %c0_i32_1 = arith.constant 0 : i32
    return %arg0, %c0_i32, %c0_i32_0 : i32, i32, i32
  }
}

</mosaic_0001>

<llo_original>
// kernel: tpu_custom_call.1
$region0: #{tpu_custom_call.1}
  #allocation0 [shape = 'u32[]', space=smem, size = 0x4, offset = 0x4, fixed_abs, tag = 'smem constant byte address 0x4 - core index']
  #allocation1 [shape = 'u32[144,128]{1,0:T(1,128)}', space=vmem, size = 0x12000, scoped, tag = 'internal scratch']
  %s0 = inlined_call_operand.vmem [shape: f32[128,16], index: 0, kind: input, shape index: {}]
  %s1 = inlined_call_operand.vmem [shape: f32[128,4], index: 1, kind: input, shape index: {}]
  %s2 = inlined_call_operand.vmem [shape: bf16[16,32], index: 2, kind: input, shape index: {}]
  %s3 = inlined_call_operand.vmem [shape: bf16[32,32], index: 3, kind: input, shape index: {}]
  %s4 = inlined_call_operand.vmem [shape: bf16[4,32], index: 4, kind: input, shape index: {}]
  %s5 = inlined_call_operand.vmem [shape: f32[8,32], index: 5, kind: input, shape index: {}]
  %s6 = inlined_call_operand.hbm [shape: f32[1,1,128], index: 6, kind: output, shape index: {}]
  %s7 = sld [smem:[#allocation0]]
  $region34: #{tpu_custom_call.1} parent=0
    _
  %s9 = ssub.s32 1, %s7
  %s10 = scalar_select 0, %s9, %s7
  $region1: #{tpu_custom_call.1} parent=0
    #allocation2 [shape = 'u8[512]{0}', space=vmem, size = 0x400, scoped, tag = 'output window, operand 0, single buffered']
    #allocation3 [shape = 's32[1]{0}', space=sflag, size = 0x4, scoped, tag = 'scoped memory for tpu_custom_call.1']
    %11 = vsyncpa [#allocation3], 0
    // Predicated region
    $region2: #{tpu_custom_call.1} parent=1 // pred_check
      _
    $region3: #{tpu_custom_call.1} parent=1 // pred_check_branch
      %13 = sbr.rel (0) target = $region5
    $region4: #{tpu_custom_call.1} parent=1 // pred_region
      _
    $region5: #{tpu_custom_call.1} parent=1 // pred_fallthru
      _
    // Predicated region
    $region6: #{tpu_custom_call.1} parent=1 // pred_check
      _
    $region7: #{tpu_custom_call.1} parent=1 // pred_check_branch
      %15 = sbr.rel (0) target = $region9
    $region8: #{tpu_custom_call.1} parent=1 // pred_region
      _
    $region9: #{tpu_custom_call.1} parent=1 // pred_fallthru
      _
    // Predicated region
    $region10: #{tpu_custom_call.1} parent=1 // pred_check
      _
    $region11: #{tpu_custom_call.1} parent=1 // pred_check_branch
      %17 = sbr.rel (0) target = $region13
    $region12: #{tpu_custom_call.1} parent=1 // pred_region
      _
    $region13: #{tpu_custom_call.1} parent=1 // pred_fallthru
      _
    // Predicated region
    $region14: #{tpu_custom_call.1} parent=1 // pred_check
      _
    $region15: #{tpu_custom_call.1} parent=1 // pred_check_branch
      %19 = sbr.rel (0) target = $region17
    $region16: #{tpu_custom_call.1} parent=1 // pred_region
      _
    $region17: #{tpu_custom_call.1} parent=1 // pred_fallthru
      _
    // Predicated region
    $region18: #{tpu_custom_call.1} parent=1 // pred_check
      _
    $region19: #{tpu_custom_call.1} parent=1 // pred_check_branch
      %21 = sbr.rel (0) target = $region21
    $region20: #{tpu_custom_call.1} parent=1 // pred_region
      _
    $region21: #{tpu_custom_call.1} parent=1 // pred_fallthru
      _
    // Predicated region
    $region22: #{tpu_custom_call.1} parent=1 // pred_check
      _
    $region23: #{tpu_custom_call.1} parent=1 // pred_check_branch
      %23 = sbr.rel (0) target = $region25
    $region24: #{tpu_custom_call.1} parent=1 // pred_region
      _
    $region25: #{tpu_custom_call.1} parent=1 // pred_fallthru
      _
    %v25 = vld [vmem:[%s0] sm:$0xff]
    %v26 = vld [vmem:[%s0 + $0x8] sm:$0xff]
    %v27 = vld [vmem:[%s0 + $0x10] sm:$0xff]
    %v28 = vld [vmem:[%s0 + $0x18] sm:$0xff]
    %v29 = vld [vmem:[%s0 + $0x20] sm:$0xff]
    %v30 = vld [vmem:[%s0 + $0x28] sm:$0xff]
    %v31 = vld [vmem:[%s0 + $0x30] sm:$0xff]
    %v32 = vld [vmem:[%s0 + $0x38] sm:$0xff]
    %v33 = vld [vmem:[%s0 + $0x40] sm:$0xff]
    %v34 = vld [vmem:[%s0 + $0x48] sm:$0xff]
    %v35 = vld [vmem:[%s0 + $0x50] sm:$0xff]
    %v36 = vld [vmem:[%s0 + $0x58] sm:$0xff]
    %v37 = vld [vmem:[%s0 + $0x60] sm:$0xff]
    %v38 = vld [vmem:[%s0 + $0x68] sm:$0xff]
    %v39 = vld [vmem:[%s0 + $0x70] sm:$0xff]
    %v40 = vld [vmem:[%s0 + $0x78] sm:$0xff]
    %v41 = vpack.c.bf16 %v26, %v25
    %v42 = vpack.c.bf16 %v28, %v27
    %v43 = vpack.c.bf16 %v30, %v29
    %v44 = vpack.c.bf16 %v32, %v31
    %v45 = vpack.c.bf16 %v34, %v33
    %v46 = vpack.c.bf16 %v36, %v35
    %v47 = vpack.c.bf16 %v38, %v37
    %v48 = vpack.c.bf16 %v40, %v39
    %v49 = vld [vmem:[%s1] sm:$0xff]
    %v50 = vld [vmem:[%s1 + $0x8] sm:$0xff]
    %v51 = vld [vmem:[%s1 + $0x10] sm:$0xff]
    %v52 = vld [vmem:[%s1 + $0x18] sm:$0xff]
    %v53 = vld [vmem:[%s1 + $0x20] sm:$0xff]
    %v54 = vld [vmem:[%s1 + $0x28] sm:$0xff]
    %v55 = vld [vmem:[%s1 + $0x30] sm:$0xff]
    %v56 = vld [vmem:[%s1 + $0x38] sm:$0xff]
    %v57 = vld [vmem:[%s1 + $0x40] sm:$0xff]
    %v58 = vld [vmem:[%s1 + $0x48] sm:$0xff]
    %v59 = vld [vmem:[%s1 + $0x50] sm:$0xff]
    %v60 = vld [vmem:[%s1 + $0x58] sm:$0xff]
    %v61 = vld [vmem:[%s1 + $0x60] sm:$0xff]
    %v62 = vld [vmem:[%s1 + $0x68] sm:$0xff]
    %v63 = vld [vmem:[%s1 + $0x70] sm:$0xff]
    %v64 = vld [vmem:[%s1 + $0x78] sm:$0xff]
    %v65 = vpack.c.bf16 %v50, %v49
    %v66 = vpack.c.bf16 %v52, %v51
    %v67 = vpack.c.bf16 %v54, %v53
    %v68 = vpack.c.bf16 %v56, %v55
    %v69 = vpack.c.bf16 %v58, %v57
    %v70 = vpack.c.bf16 %v60, %v59
    %v71 = vpack.c.bf16 %v62, %v61
    %v72 = vpack.c.bf16 %v64, %v63
    %v73 = vld [vmem:[%s5] sm:$0xff]
    %v74 = vld [vmem:[%s2] sm:$0xf]
    %v75 = vld [vmem:[%s2 + $0x4] sm:$0xf]
    %v76 = vlaneseq
    %v77 = vshrl.u32 %v76, 7
    %v78 = vsub.s32 0, %v77
    %v79 = vrot.slane %v73, %v78
    %v82 = vunpack.c.l.b16 %v74
    %v83 = vunpack.c.l.b16 %v75
    %v84 = vpack.c.b16 %v83, %v82
    %vm86 = vcmask 130048
    %v88 = vsel %vm86, %v41, 0
    %v91 = vsel %vm86, %v42, 0
    %v94 = vsel %vm86, %v43, 0
    %v97 = vsel %vm86, %v44, 0
    %v100 = vsel %vm86, %v45, 0
    %v103 = vsel %vm86, %v46, 0
    %v106 = vsel %vm86, %v47, 0
    %v109 = vsel %vm86, %v48, 0
    %111 = vmatprep.subr.bf16.mxu0 0
    %112 = vmatpush1.bf16.msra.mxu0 %v84
    %113 = vmatprep.subr.bf16.mxu0 0
    %114 = vmatpush1.bf16.msra.mxu0 0
    %115 = vmatprep.subr.bf16.mxu0 0
    %116 = vmatpush1.bf16.msra.mxu0 0
    %117 = vmatprep.subr.bf16.mxu0 0
    %118 = vmatpush1.bf16.msra.mxu0 0
    %119 = vmatprep.subr.bf16.mxu0 0
    %120 = vmatpush1.bf16.msra.mxu0 0
    %121 = vmatprep.subr.bf16.mxu0 0
    %122 = vmatpush1.bf16.msra.mxu0 0
    %123 = vmatprep.subr.bf16.mxu0 0
    %124 = vmatpush1.bf16.msra.mxu0 0
    %125 = vmatprep.subr.bf16.mxu0 0
    %126 = vmatpush1.bf16.msra.mxu0 0
    %127 = vmatprep.subr.bf16.mxu0 0
    %128 = vmatpush1.bf16.msra.mxu0 0
    %129 = vmatprep.subr.bf16.mxu0 0
    %130 = vmatpush1.bf16.msra.mxu0 0
    %131 = vmatprep.subr.bf16.mxu0 0
    %132 = vmatpush1.bf16.msra.mxu0 0
    %133 = vmatprep.subr.bf16.mxu0 0
    %134 = vmatpush1.bf16.msra.mxu0 0
    %135 = vmatprep.subr.bf16.mxu0 0
    %136 = vmatpush1.bf16.msra.mxu0 0
    %137 = vmatprep.subr.bf16.mxu0 0
    %138 = vmatpush1.bf16.msra.mxu0 0
    %139 = vmatprep.subr.bf16.mxu0 0
    %140 = vmatpush1.bf16.msra.mxu0 0
    %141 = vmatprep.subr.bf16.mxu0 0
    %142 = vmatpush1.bf16.msra.mxu0 0
    %143 = vmatprep.mubr.bf16.mxu0 0
    %144 = vmatmul.mubr.bf16.gmra.mrb[0].mxu0 %v88
    %v145 = vpop.f32.mrb[0].mxu0
    %v146 = vadd.f32 %v79, %v145
    %v147 = vpop.f32.mrb[0].mxu0
    %v148 = vpop.f32.mrb[0].mxu0
    %v149 = vadd.f32 %v79, %v148
    %v150 = vpop.f32.mrb[0].mxu0
    %151 = vmatprep.mubr.bf16.mxu0 0
    %152 = vmatmul.mubr.bf16.gmra.mrb[0].mxu0 %v91
    %v153 = vpop.f32.mrb[0].mxu0
    %v154 = vadd.f32 %v79, %v153
    %v155 = vpop.f32.mrb[0].mxu0
    %v156 = vpop.f32.mrb[0].mxu0
    %v157 = vadd.f32 %v79, %v156
    %v158 = vpop.f32.mrb[0].mxu0
    %159 = vmatprep.mubr.bf16.mxu0 0
    %160 = vmatmul.mubr.bf16.gmra.mrb[0].mxu0 %v94
    %v161 = vpop.f32.mrb[0].mxu0
    %v162 = vadd.f32 %v79, %v161
    %v163 = vpop.f32.mrb[0].mxu0
    %v164 = vpop.f32.mrb[0].mxu0
    %v165 = vadd.f32 %v79, %v164
    %v166 = vpop.f32.mrb[0].mxu0
    %167 = vmatprep.mubr.bf16.mxu0 0
    %168 = vmatmul.mubr.bf16.gmra.mrb[0].mxu0 %v97
    %v169 = vpop.f32.mrb[0].mxu0
    %v170 = vadd.f32 %v79, %v169
    %v171 = vpop.f32.mrb[0].mxu0
    %v172 = vpop.f32.mrb[0].mxu0
    %v173 = vadd.f32 %v79, %v172
    %v174 = vpop.f32.mrb[0].mxu0
    %175 = vmatprep.mubr.bf16.mxu0 0
    %176 = vmatmul.mubr.bf16.gmra.mrb[0].mxu0 %v100
    %v177 = vpop.f32.mrb[0].mxu0
    %v178 = vadd.f32 %v79, %v177
    %v179 = vpop.f32.mrb[0].mxu0
    %v180 = vpop.f32.mrb[0].mxu0
    %v181 = vadd.f32 %v79, %v180
    %v182 = vpop.f32.mrb[0].mxu0
    %183 = vmatprep.mubr.bf16.mxu0 0
    %184 = vmatmul.mubr.bf16.gmra.mrb[0].mxu0 %v103
    %v185 = vpop.f32.mrb[0].mxu0
    %v186 = vadd.f32 %v79, %v185
    %v187 = vpop.f32.mrb[0].mxu0
    %v188 = vpop.f32.mrb[0].mxu0
    %v189 = vadd.f32 %v79, %v188
    %v190 = vpop.f32.mrb[0].mxu0
    %191 = vmatprep.mubr.bf16.mxu0 0
    %192 = vmatmul.mubr.bf16.gmra.mrb[0].mxu0 %v106
    %v193 = vpop.f32.mrb[0].mxu0
    %v194 = vadd.f32 %v79, %v193
    %v195 = vpop.f32.mrb[0].mxu0
    %v196 = vpop.f32.mrb[0].mxu0
    %v197 = vadd.f32 %v79, %v196
    %v198 = vpop.f32.mrb[0].mxu0
    %199 = vmatprep.mubr.bf16.mxu0 0
    %200 = vmatmul.mubr.bf16.gmra.mrb[0].mxu0 %v109
    %v201 = vpop.f32.mrb[0].mxu0
    %v202 = vadd.f32 %v79, %v201
    %v203 = vpop.f32.mrb[0].mxu0
    %v204 = vpop.f32.mrb[0].mxu0
    %v205 = vadd.f32 %v79, %v204
    %v206 = vpop.f32.mrb[0].mxu0
    %207 = vdwg.mxu0
    %vm208 = vcmask 261120
    %v209 = vsel %vm208, %v146, 0.0
    %210 = vadd.xlane.f32.xlu0 %v209
    %v211 = vpop.xlane.xlu0 %210
    %v212 = vsel %vm208, %v149, 0.0
    %213 = vadd.xlane.f32.xlu0 %v212
    %v214 = vpop.xlane.xlu0 %213
    %v215 = vsel %vm208, %v154, 0.0
    %216 = vadd.xlane.f32.xlu0 %v215
    %v217 = vpop.xlane.xlu0 %216
    %v218 = vsel %vm208, %v157, 0.0
    %219 = vadd.xlane.f32.xlu0 %v218
    %v220 = vpop.xlane.xlu0 %219
    %v221 = vsel %vm208, %v162, 0.0
    %222 = vadd.xlane.f32.xlu0 %v221
    %v223 = vpop.xlane.xlu0 %222
    %v224 = vsel %vm208, %v165, 0.0
    %225 = vadd.xlane.f32.xlu0 %v224
    %v226 = vpop.xlane.xlu0 %225
    %v227 = vsel %vm208, %v170, 0.0
    %228 = vadd.xlane.f32.xlu0 %v227
    %v229 = vpop.xlane.xlu0 %228
    %v230 = vsel %vm208, %v173, 0.0
    %231 = vadd.xlane.f32.xlu0 %v230
    %v232 = vpop.xlane.xlu0 %231
    %v233 = vsel %vm208, %v178, 0.0
    %234 = vadd.xlane.f32.xlu0 %v233
    %v235 = vpop.xlane.xlu0 %234
    %v236 = vsel %vm208, %v181, 0.0
    %237 = vadd.xlane.f32.xlu0 %v236
    %v238 = vpop.xlane.xlu0 %237
    %v239 = vsel %vm208, %v186, 0.0
    %240 = vadd.xlane.f32.xlu0 %v239
    %v241 = vpop.xlane.xlu0 %240
    %v242 = vsel %vm208, %v189, 0.0
    %243 = vadd.xlane.f32.xlu0 %v242
    %v244 = vpop.xlane.xlu0 %243
    %v245 = vsel %vm208, %v194, 0.0
    %246 = vadd.xlane.f32.xlu0 %v245
    %v247 = vpop.xlane.xlu0 %246
    %v248 = vsel %vm208, %v197, 0.0
    %249 = vadd.xlane.f32.xlu0 %v248
    %v250 = vpop.xlane.xlu0 %249
    %v251 = vsel %vm208, %v202, 0.0
    %252 = vadd.xlane.f32.xlu0 %v251
    %v253 = vpop.xlane.xlu0 %252
    %v254 = vsel %vm208, %v205, 0.0
    %255 = vadd.xlane.f32.xlu0 %v254
    %v256 = vpop.xlane.xlu0 %255
    %v257 = vrcp.pop 32.0
    %v258 = vmul.f32 %v211, %v257
    %v259 = vmul.f32 %v214, %v257
    %v260 = vmul.f32 %v217, %v257
    %v261 = vmul.f32 %v220, %v257
    %v262 = vmul.f32 %v223, %v257
    %v263 = vmul.f32 %v226, %v257
    %v264 = vmul.f32 %v229, %v257
    %v265 = vmul.f32 %v232, %v257
    %v266 = vmul.f32 %v235, %v257
    %v267 = vmul.f32 %v238, %v257
    %v268 = vmul.f32 %v241, %v257
    %v269 = vmul.f32 %v244, %v257
    %v270 = vmul.f32 %v247, %v257
    %v271 = vmul.f32 %v250, %v257
    %v272 = vmul.f32 %v253, %v257
    %v273 = vmul.f32 %v256, %v257
    %v274 = vsub.f32 %v146, %v258
    %v275 = vsub.f32 %v149, %v259
    %v276 = vsub.f32 %v154, %v260
    %v277 = vsub.f32 %v157, %v261
    %v278 = vsub.f32 %v162, %v262
    %v279 = vsub.f32 %v165, %v263
    %v280 = vsub.f32 %v170, %v264
    %v281 = vsub.f32 %v173, %v265
    %v282 = vsub.f32 %v178, %v266
    %v283 = vsub.f32 %v181, %v267
    %v284 = vsub.f32 %v186, %v268
    %v285 = vsub.f32 %v189, %v269
    %v286 = vsub.f32 %v194, %v270
    %v287 = vsub.f32 %v197, %v271
    %v288 = vsub.f32 %v202, %v272
    %v289 = vsub.f32 %v205, %v273
    %v290 = vmul.f32 %v274, %v274
    %v291 = vmul.f32 %v275, %v275
    %v292 = vmul.f32 %v276, %v276
    %v293 = vmul.f32 %v277, %v277
    %v294 = vmul.f32 %v278, %v278
    %v295 = vmul.f32 %v279, %v279
    %v296 = vmul.f32 %v280, %v280
    %v297 = vmul.f32 %v281, %v281
    %v298 = vmul.f32 %v282, %v282
    %v299 = vmul.f32 %v283, %v283
    %v300 = vmul.f32 %v284, %v284
    %v301 = vmul.f32 %v285, %v285
    %v302 = vmul.f32 %v286, %v286
    %v303 = vmul.f32 %v287, %v287
    %v304 = vmul.f32 %v288, %v288
    %v305 = vmul.f32 %v289, %v289
    %v306 = vsel %vm208, %v290, 0.0
    %307 = vadd.xlane.f32.xlu0 %v306
    %v308 = vpop.xlane.xlu0 %307
    %v309 = vsel %vm208, %v291, 0.0
    %310 = vadd.xlane.f32.xlu0 %v309
    %v311 = vpop.xlane.xlu0 %310
    %v312 = vsel %vm208, %v292, 0.0
    %313 = vadd.xlane.f32.xlu0 %v312
    %v314 = vpop.xlane.xlu0 %313
    %v315 = vsel %vm208, %v293, 0.0
    %316 = vadd.xlane.f32.xlu0 %v315
    %v317 = vpop.xlane.xlu0 %316
    %v318 = vsel %vm208, %v294, 0.0
    %319 = vadd.xlane.f32.xlu0 %v318
    %v320 = vpop.xlane.xlu0 %319
    %v321 = vsel %vm208, %v295, 0.0
    %322 = vadd.xlane.f32.xlu0 %v321
    %v323 = vpop.xlane.xlu0 %322
    %v324 = vsel %vm208, %v296, 0.0
    %325 = vadd.xlane.f32.xlu0 %v324
    %v326 = vpop.xlane.xlu0 %325
    %v327 = vsel %vm208, %v297, 0.0
    %328 = vadd.xlane.f32.xlu0 %v327
    %v329 = vpop.xlane.xlu0 %328
    %v330 = vsel %vm208, %v298, 0.0
    %331 = vadd.xlane.f32.xlu0 %v330
    %v332 = vpop.xlane.xlu0 %331
    %v333 = vsel %vm208, %v299, 0.0
    %334 = vadd.xlane.f32.xlu0 %v333
    %v335 = vpop.xlane.xlu0 %334
    %v336 = vsel %vm208, %v300, 0.0
    %337 = vadd.xlane.f32.xlu0 %v336
    %v338 = vpop.xlane.xlu0 %337
    %v339 = vsel %vm208, %v301, 0.0
    %340 = vadd.xlane.f32.xlu0 %v339
    %v341 = vpop.xlane.xlu0 %340
    %v342 = vsel %vm208, %v302, 0.0
    %343 = vadd.xlane.f32.xlu0 %v342
    %v344 = vpop.xlane.xlu0 %343
    %v345 = vsel %vm208, %v303, 0.0
    %346 = vadd.xlane.f32.xlu0 %v345
    %v347 = vpop.xlane.xlu0 %346
    %v348 = vsel %vm208, %v304, 0.0
    %349 = vadd.xlane.f32.xlu0 %v348
    %v350 = vpop.xlane.xlu0 %349
    %v351 = vsel %vm208, %v305, 0.0
    %352 = vadd.xlane.f32.xlu0 %v351
    %v353 = vpop.xlane.xlu0 %352
    %v354 = vmul.f32 %v308, %v257
    %v355 = vmul.f32 %v311, %v257
    %v356 = vmul.f32 %v314, %v257
    %v357 = vmul.f32 %v317, %v257
    %v358 = vmul.f32 %v320, %v257
    %v359 = vmul.f32 %v323, %v257
    %v360 = vmul.f32 %v326, %v257
    %v361 = vmul.f32 %v329, %v257
    %v362 = vmul.f32 %v332, %v257
    %v363 = vmul.f32 %v335, %v257
    %v364 = vmul.f32 %v338, %v257
    %v365 = vmul.f32 %v341, %v257
    %v366 = vmul.f32 %v344, %v257
    %v367 = vmul.f32 %v347, %v257
    %v368 = vmul.f32 %v350, %v257
    %v369 = vmul.f32 %v353, %v257
    %v370 = vadd.f32 %v354, 1e-05
    %v371 = vadd.f32 %v355, 1e-05
    %v372 = vadd.f32 %v356, 1e-05
    %v373 = vadd.f32 %v357, 1e-05
    %v374 = vadd.f32 %v358, 1e-05
    %v375 = vadd.f32 %v359, 1e-05
    %v376 = vadd.f32 %v360, 1e-05
    %v377 = vadd.f32 %v361, 1e-05
    %v378 = vadd.f32 %v362, 1e-05
    %v379 = vadd.f32 %v363, 1e-05
    %v380 = vadd.f32 %v364, 1e-05
    %v381 = vadd.f32 %v365, 1e-05
    %v382 = vadd.f32 %v366, 1e-05
    %v383 = vadd.f32 %v367, 1e-05
    %v384 = vadd.f32 %v368, 1e-05
    %v385 = vadd.f32 %v369, 1e-05
    %v386 = vrsqrt.pop %v370
    %v387 = vrsqrt.pop %v371
    %v388 = vrsqrt.pop %v372
    %v389 = vrsqrt.pop %v373
    %v390 = vrsqrt.pop %v374
    %v391 = vrsqrt.pop %v375
    %v392 = vrsqrt.pop %v376
    %v393 = vrsqrt.pop %v377
    %v394 = vrsqrt.pop %v378
    %v395 = vrsqrt.pop %v379
    %v396 = vrsqrt.pop %v380
    %v397 = vrsqrt.pop %v381
    %v398 = vrsqrt.pop %v382
    %v399 = vrsqrt.pop %v383
    %v400 = vrsqrt.pop %v384
    %v401 = vrsqrt.pop %v385
    %v402 = vmul.f32 %v274, %v386
    %v403 = vmul.f32 %v275, %v387
    %v404 = vmul.f32 %v276, %v388
    %v405 = vmul.f32 %v277, %v389
    %v406 = vmul.f32 %v278, %v390
    %v407 = vmul.f32 %v279, %v391
    %v408 = vmul.f32 %v280, %v392
    %v409 = vmul.f32 %v281, %v393
    %v410 = vmul.f32 %v282, %v394
    %v411 = vmul.f32 %v283, %v395
    %v412 = vmul.f32 %v284, %v396
    %v413 = vmul.f32 %v285, %v397
    %v414 = vmul.f32 %v286, %v398
    %v415 = vmul.f32 %v287, %v399
    %v416 = vmul.f32 %v288, %v400
    %v417 = vmul.f32 %v289, %v401
    %v418 = vlaneseq
    %v419 = vshrl.u32 %v418, 7
    %v420 = vsub.s32 1, %v419
    %v421 = vrot.slane %v73, %v420
    %v422 = vmul.f32 %v402, %v421
    %v423 = vmul.f32 %v403, %v421
    %v424 = vmul.f32 %v404, %v421
    %v425 = vmul.f32 %v405, %v421
    %v426 = vmul.f32 %v406, %v421
    %v427 = vmul.f32 %v407, %v421
    %v428 = vmul.f32 %v408, %v421
    %v429 = vmul.f32 %v409, %v421
    %v430 = vmul.f32 %v410, %v421
    %v431 = vmul.f32 %v411, %v421
    %v432 = vmul.f32 %v412, %v421
    %v433 = vmul.f32 %v413, %v421
    %v434 = vmul.f32 %v414, %v421
    %v435 = vmul.f32 %v415, %v421
    %v436 = vmul.f32 %v416, %v421
    %v437 = vmul.f32 %v417, %v421
    %v438 = vlaneseq
    %v439 = vshrl.u32 %v438, 7
    %v440 = vsub.s32 2, %v439
    %v441 = vrot.slane %v73, %v440
    %v442 = vadd.f32 %v422, %v441
    %v443 = vadd.f32 %v423, %v441
    %v444 = vadd.f32 %v424, %v441
    %v445 = vadd.f32 %v425, %v441
    %v446 = vadd.f32 %v426, %v441
    %v447 = vadd.f32 %v427, %v441
    %v448 = vadd.f32 %v428, %v441
    %v449 = vadd.f32 %v429, %v441
    %v450 = vadd.f32 %v430, %v441
    %v451 = vadd.f32 %v431, %v441
    %v452 = vadd.f32 %v432, %v441
    %v453 = vadd.f32 %v433, %v441
    %v454 = vadd.f32 %v434, %v441
    %v455 = vadd.f32 %v435, %v441
    %v456 = vadd.f32 %v436, %v441
    %v457 = vadd.f32 %v437, %v441
    %v458 = vmax.f32 %v442, 0.0
    %v459 = vmax.f32 %v443, 0.0
    %v460 = vmax.f32 %v444, 0.0
    %v461 = vmax.f32 %v445, 0.0
    %v462 = vmax.f32 %v446, 0.0
    %v463 = vmax.f32 %v447, 0.0
    %v464 = vmax.f32 %v448, 0.0
    %v465 = vmax.f32 %v449, 0.0
    %v466 = vmax.f32 %v450, 0.0
    %v467 = vmax.f32 %v451, 0.0
    %v468 = vmax.f32 %v452, 0.0
    %v469 = vmax.f32 %v453, 0.0
    %v470 = vmax.f32 %v454, 0.0
    %v471 = vmax.f32 %v455, 0.0
    %v472 = vmax.f32 %v456, 0.0
    %v473 = vmax.f32 %v457, 0.0
    %v474 = vpack.c.bf16 %v459, %v458
    %v475 = vpack.c.bf16 %v461, %v460
    %v476 = vpack.c.bf16 %v463, %v462
    %v477 = vpack.c.bf16 %v465, %v464
    %v478 = vpack.c.bf16 %v467, %v466
    %v479 = vpack.c.bf16 %v469, %v468
    %v480 = vpack.c.bf16 %v471, %v470
    %v481 = vpack.c.bf16 %v473, %v472
    %v482 = vld [vmem:[%s3] sm:$0xf]
    %v483 = vld [vmem:[%s3 + $0x4] sm:$0xf]
    %v484 = vld [vmem:[%s3 + $0x8] sm:$0xf]
    %v485 = vld [vmem:[%s3 + $0xc] sm:$0xf]
    %v486 = vld [vmem:[%s4] sm:$0x3]
    %vm487 = vcmask 31744
    %v489 = vsel %vm487, %v65, 0
    %v492 = vsel %vm487, %v66, 0
    %v495 = vsel %vm487, %v67, 0
    %v498 = vsel %vm487, %v68, 0
    %v501 = vsel %vm487, %v69, 0
    %v504 = vsel %vm487, %v70, 0
    %v507 = vsel %vm487, %v71, 0
    %v510 = vsel %vm487, %v72, 0
    %vm512 = vcmask 1041408
    %v514 = vsel %vm512, %v486, 0
    %516 = vmatprep.subr.bf16.mxu0 0
    %517 = vmatpush1.bf16.msra.mxu0 %v514
    %518 = vmatprep.subr.bf16.mxu0 0
    %519 = vmatpush1.bf16.msra.mxu0 0
    %520 = vmatprep.subr.bf16.mxu0 0
    %521 = vmatpush1.bf16.msra.mxu0 0
    %522 = vmatprep.subr.bf16.mxu0 0
    %523 = vmatpush1.bf16.msra.mxu0 0
    %524 = vmatprep.subr.bf16.mxu0 0
    %525 = vmatpush1.bf16.msra.mxu0 0
    %526 = vmatprep.subr.bf16.mxu0 0
    %527 = vmatpush1.bf16.msra.mxu0 0
    %528 = vmatprep.subr.bf16.mxu0 0
    %529 = vmatpush1.bf16.msra.mxu0 0
    %530 = vmatprep.subr.bf16.mxu0 0
    %531 = vmatpush1.bf16.msra.mxu0 0
    %532 = vmatprep.subr.bf16.mxu0 0
    %533 = vmatpush1.bf16.msra.mxu0 0
    %534 = vmatprep.subr.bf16.mxu0 0
    %535 = vmatpush1.bf16.msra.mxu0 0
    %536 = vmatprep.subr.bf16.mxu0 0
    %537 = vmatpush1.bf16.msra.mxu0 0
    %538 = vmatprep.subr.bf16.mxu0 0
    %539 = vmatpush1.bf16.msra.mxu0 0
    %540 = vmatprep.subr.bf16.mxu0 0
    %541 = vmatpush1.bf16.msra.mxu0 0
    %542 = vmatprep.subr.bf16.mxu0 0
    %543 = vmatpush1.bf16.msra.mxu0 0
    %544 = vmatprep.subr.bf16.mxu0 0
    %545 = vmatpush1.bf16.msra.mxu0 0
    %546 = vmatprep.subr.bf16.mxu0 0
    %547 = vmatpush1.bf16.msra.mxu0 0
    %548 = vmatprep.mubr.bf16.mxu0 0
    %549 = vmatmul.mubr.bf16.gmra.mrb[0].mxu0 %v489
    %v550 = vpop.f32.mrb[0].mxu0
    %v551 = vadd.f32 0.0, %v550
    %v552 = vpop.f32.mrb[0].mxu0
    %v553 = vpop.f32.mrb[0].mxu0
    %v554 = vadd.f32 0.0, %v553
    %v555 = vpop.f32.mrb[0].mxu0
    %556 = vmatprep.mubr.bf16.mxu0 0
    %557 = vmatmul.mubr.bf16.gmra.mrb[0].mxu0 %v492
    %v558 = vpop.f32.mrb[0].mxu0
    %v559 = vadd.f32 0.0, %v558
    %v560 = vpop.f32.mrb[0].mxu0
    %v561 = vpop.f32.mrb[0].mxu0
    %v562 = vadd.f32 0.0, %v561
    %v563 = vpop.f32.mrb[0].mxu0
    %564 = vmatprep.mubr.bf16.mxu0 0
    %565 = vmatmul.mubr.bf16.gmra.mrb[0].mxu0 %v495
    %v566 = vpop.f32.mrb[0].mxu0
    %v567 = vadd.f32 0.0, %v566
    %v568 = vpop.f32.mrb[0].mxu0
    %v569 = vpop.f32.mrb[0].mxu0
    %v570 = vadd.f32 0.0, %v569
    %v571 = vpop.f32.mrb[0].mxu0
    %572 = vmatprep.mubr.bf16.mxu0 0
    %573 = vmatmul.mubr.bf16.gmra.mrb[0].mxu0 %v498
    %v574 = vpop.f32.mrb[0].mxu0
    %v575 = vadd.f32 0.0, %v574
    %v576 = vpop.f32.mrb[0].mxu0
    %v577 = vpop.f32.mrb[0].mxu0
    %v578 = vadd.f32 0.0, %v577
    %v579 = vpop.f32.mrb[0].mxu0
    %580 = vmatprep.mubr.bf16.mxu0 0
    %581 = vmatmul.mubr.bf16.gmra.mrb[0].mxu0 %v501
    %v582 = vpop.f32.mrb[0].mxu0
    %v583 = vadd.f32 0.0, %v582
    %v584 = vpop.f32.mrb[0].mxu0
    %v585 = vpop.f32.mrb[0].mxu0
    %v586 = vadd.f32 0.0, %v585
    %v587 = vpop.f32.mrb[0].mxu0
    %588 = vmatprep.mubr.bf16.mxu0 0
    %589 = vmatmul.mubr.bf16.gmra.mrb[0].mxu0 %v504
    %v590 = vpop.f32.mrb[0].mxu0
    %v591 = vadd.f32 0.0, %v590
    %v592 = vpop.f32.mrb[0].mxu0
    %v593 = vpop.f32.mrb[0].mxu0
    %v594 = vadd.f32 0.0, %v593
    %v595 = vpop.f32.mrb[0].mxu0
    %596 = vmatprep.mubr.bf16.mxu0 0
    %597 = vmatmul.mubr.bf16.gmra.mrb[0].mxu0 %v507
    %v598 = vpop.f32.mrb[0].mxu0
    %v599 = vadd.f32 0.0, %v598
    %v600 = vpop.f32.mrb[0].mxu0
    %v601 = vpop.f32.mrb[0].mxu0
    %v602 = vadd.f32 0.0, %v601
    %v603 = vpop.f32.mrb[0].mxu0
    %604 = vmatprep.mubr.bf16.mxu0 0
    %605 = vmatmul.mubr.bf16.gmra.mrb[0].mxu0 %v510
    %v606 = vpop.f32.mrb[0].mxu0
    %v607 = vadd.f32 0.0, %v606
    %v608 = vpop.f32.mrb[0].mxu0
    %v609 = vpop.f32.mrb[0].mxu0
    %v610 = vadd.f32 0.0, %v609
    %v611 = vpop.f32.mrb[0].mxu0
    %612 = vdwg.mxu0
    %v617 = vunpack.c.l.b16 %v482
    %v618 = vunpack.c.l.b16 %v483
    %v619 = vunpack.c.l.b16 %v484
    %v620 = vunpack.c.l.b16 %v485
    %v621 = vpack.c.b16 %v618, %v617
    %v622 = vpack.c.b16 %v620, %v619
    %v626 = vsel %vm208, %v474, 0
    %v629 = vsel %vm208, %v475, 0
    %v632 = vsel %vm208, %v476, 0
    %v635 = vsel %vm208, %v477, 0
    %v638 = vsel %vm208, %v478, 0
    %v641 = vsel %vm208, %v479, 0
    %v644 = vsel %vm208, %v480, 0
    %v647 = vsel %vm208, %v481, 0
    %649 = vmatprep.subr.bf16.mxu0 0
    %650 = vmatpush1.bf16.msra.mxu0 %v621
    %651 = vmatprep.subr.bf16.mxu0 0
    %652 = vmatpush1.bf16.msra.mxu0 %v622
    %653 = vmatprep.subr.bf16.mxu0 0
    %654 = vmatpush1.bf16.msra.mxu0 0
    %655 = vmatprep.subr.bf16.mxu0 0
    %656 = vmatpush1.bf16.msra.mxu0 0
    %657 = vmatprep.subr.bf16.mxu0 0
    %658 = vmatpush1.bf16.msra.mxu0 0
    %659 = vmatprep.subr.bf16.mxu0 0
    %660 = vmatpush1.bf16.msra.mxu0 0
    %661 = vmatprep.subr.bf16.mxu0 0
    %662 = vmatpush1.bf16.msra.mxu0 0
    %663 = vmatprep.subr.bf16.mxu0 0
    %664 = vmatpush1.bf16.msra.mxu0 0
    %665 = vmatprep.subr.bf16.mxu0 0
    %666 = vmatpush1.bf16.msra.mxu0 0
    %667 = vmatprep.subr.bf16.mxu0 0
    %668 = vmatpush1.bf16.msra.mxu0 0
    %669 = vmatprep.subr.bf16.mxu0 0
    %670 = vmatpush1.bf16.msra.mxu0 0
    %671 = vmatprep.subr.bf16.mxu0 0
    %672 = vmatpush1.bf16.msra.mxu0 0
    %673 = vmatprep.subr.bf16.mxu0 0
    %674 = vmatpush1.bf16.msra.mxu0 0
    %675 = vmatprep.subr.bf16.mxu0 0
    %676 = vmatpush1.bf16.msra.mxu0 0
    %677 = vmatprep.subr.bf16.mxu0 0
    %678 = vmatpush1.bf16.msra.mxu0 0
    %679 = vmatprep.subr.bf16.mxu0 0
    %680 = vmatpush1.bf16.msra.mxu0 0
    %681 = vmatprep.mubr.bf16.mxu0 0
    %682 = vmatmul.mubr.bf16.gmra.mrb[0].mxu0 %v626
    %v683 = vpop.f32.mrb[0].mxu0
    %v684 = vadd.f32 %v551, %v683
    %v685 = vpop.f32.mrb[0].mxu0
    %v686 = vpop.f32.mrb[0].mxu0
    %v687 = vadd.f32 %v554, %v686
    %v688 = vpop.f32.mrb[0].mxu0
    %689 = vmatprep.mubr.bf16.mxu0 0
    %690 = vmatmul.mubr.bf16.gmra.mrb[0].mxu0 %v629
    %v691 = vpop.f32.mrb[0].mxu0
    %v692 = vadd.f32 %v559, %v691
    %v693 = vpop.f32.mrb[0].mxu0
    %v694 = vpop.f32.mrb[0].mxu0
    %v695 = vadd.f32 %v562, %v694
    %v696 = vpop.f32.mrb[0].mxu0
    %697 = vmatprep.mubr.bf16.mxu0 0
    %698 = vmatmul.mubr.bf16.gmra.mrb[0].mxu0 %v632
    %v699 = vpop.f32.mrb[0].mxu0
    %v700 = vadd.f32 %v567, %v699
    %v701 = vpop.f32.mrb[0].mxu0
    %v702 = vpop.f32.mrb[0].mxu0
    %v703 = vadd.f32 %v570, %v702
    %v704 = vpop.f32.mrb[0].mxu0
    %705 = vmatprep.mubr.bf16.mxu0 0
    %706 = vmatmul.mubr.bf16.gmra.mrb[0].mxu0 %v635
    %v707 = vpop.f32.mrb[0].mxu0
    %v708 = vadd.f32 %v575, %v707
    %v709 = vpop.f32.mrb[0].mxu0
    %v710 = vpop.f32.mrb[0].mxu0
    %v711 = vadd.f32 %v578, %v710
    %v712 = vpop.f32.mrb[0].mxu0
    %713 = vmatprep.mubr.bf16.mxu0 0
    %714 = vmatmul.mubr.bf16.gmra.mrb[0].mxu0 %v638
    %v715 = vpop.f32.mrb[0].mxu0
    %v716 = vadd.f32 %v583, %v715
    %v717 = vpop.f32.mrb[0].mxu0
    %v718 = vpop.f32.mrb[0].mxu0
    %v719 = vadd.f32 %v586, %v718
    %v720 = vpop.f32.mrb[0].mxu0
    %721 = vmatprep.mubr.bf16.mxu0 0
    %722 = vmatmul.mubr.bf16.gmra.mrb[0].mxu0 %v641
    %v723 = vpop.f32.mrb[0].mxu0
    %v724 = vadd.f32 %v591, %v723
    %v725 = vpop.f32.mrb[0].mxu0
    %v726 = vpop.f32.mrb[0].mxu0
    %v727 = vadd.f32 %v594, %v726
    %v728 = vpop.f32.mrb[0].mxu0
    %729 = vmatprep.mubr.bf16.mxu0 0
    %730 = vmatmul.mubr.bf16.gmra.mrb[0].mxu0 %v644
    %v731 = vpop.f32.mrb[0].mxu0
    %v732 = vadd.f32 %v599, %v731
    %v733 = vpop.f32.mrb[0].mxu0
    %v734 = vpop.f32.mrb[0].mxu0
    %v735 = vadd.f32 %v602, %v734
    %v736 = vpop.f32.mrb[0].mxu0
    %737 = vmatprep.mubr.bf16.mxu0 0
    %738 = vmatmul.mubr.bf16.gmra.mrb[0].mxu0 %v647
    %v739 = vpop.f32.mrb[0].mxu0
    %v740 = vadd.f32 %v607, %v739
    %v741 = vpop.f32.mrb[0].mxu0
    %v742 = vpop.f32.mrb[0].mxu0
    %v743 = vadd.f32 %v610, %v742
    %v744 = vpop.f32.mrb[0].mxu0
    %745 = vdwg.mxu0
    %v746 = vlaneseq
    %v747 = vshrl.u32 %v746, 7
    %v748 = vsub.s32 3, %v747
    %v749 = vrot.slane %v73, %v748
    %v750 = vadd.f32 %v684, %v749
    %v751 = vadd.f32 %v687, %v749
    %v752 = vadd.f32 %v692, %v749
    %v753 = vadd.f32 %v695, %v749
    %v754 = vadd.f32 %v700, %v749
    %v755 = vadd.f32 %v703, %v749
    %v756 = vadd.f32 %v708, %v749
    %v757 = vadd.f32 %v711, %v749
    %v758 = vadd.f32 %v716, %v749
    %v759 = vadd.f32 %v719, %v749
    %v760 = vadd.f32 %v724, %v749
    %v761 = vadd.f32 %v727, %v749
    %v762 = vadd.f32 %v732, %v749
    %v763 = vadd.f32 %v735, %v749
    %v764 = vadd.f32 %v740, %v749
    %v765 = vadd.f32 %v743, %v749
    %v766 = vsel %vm208, %v750, 0.0
    %767 = vadd.xlane.f32.xlu0 %v766
    %v768 = vpop.xlane.xlu0 %767
    %v769 = vsel %vm208, %v751, 0.0
    %770 = vadd.xlane.f32.xlu0 %v769
    %v771 = vpop.xlane.xlu0 %770
    %v772 = vsel %vm208, %v752, 0.0
    %773 = vadd.xlane.f32.xlu0 %v772
    %v774 = vpop.xlane.xlu0 %773
    %v775 = vsel %vm208, %v753, 0.0
    %776 = vadd.xlane.f32.xlu0 %v775
    %v777 = vpop.xlane.xlu0 %776
    %v778 = vsel %vm208, %v754, 0.0
    %779 = vadd.xlane.f32.xlu0 %v778
    %v780 = vpop.xlane.xlu0 %779
    %v781 = vsel %vm208, %v755, 0.0
    %782 = vadd.xlane.f32.xlu0 %v781
    %v783 = vpop.xlane.xlu0 %782
    %v784 = vsel %vm208, %v756, 0.0
    %785 = vadd.xlane.f32.xlu0 %v784
    %v786 = vpop.xlane.xlu0 %785
    %v787 = vsel %vm208, %v757, 0.0
    %788 = vadd.xlane.f32.xlu0 %v787
    %v789 = vpop.xlane.xlu0 %788
    %v790 = vsel %vm208, %v758, 0.0
    %791 = vadd.xlane.f32.xlu0 %v790
    %v792 = vpop.xlane.xlu0 %791
    %v793 = vsel %vm208, %v759, 0.0
    %794 = vadd.xlane.f32.xlu0 %v793
    %v795 = vpop.xlane.xlu0 %794
    %v796 = vsel %vm208, %v760, 0.0
    %797 = vadd.xlane.f32.xlu0 %v796
    %v798 = vpop.xlane.xlu0 %797
    %v799 = vsel %vm208, %v761, 0.0
    %800 = vadd.xlane.f32.xlu0 %v799
    %v801 = vpop.xlane.xlu0 %800
    %v802 = vsel %vm208, %v762, 0.0
    %803 = vadd.xlane.f32.xlu0 %v802
    %v804 = vpop.xlane.xlu0 %803
    %v805 = vsel %vm208, %v763, 0.0
    %806 = vadd.xlane.f32.xlu0 %v805
    %v807 = vpop.xlane.xlu0 %806
    %v808 = vsel %vm208, %v764, 0.0
    %809 = vadd.xlane.f32.xlu0 %v808
    %v810 = vpop.xlane.xlu0 %809
    %v811 = vsel %vm208, %v765, 0.0
    %812 = vadd.xlane.f32.xlu0 %v811
    %v813 = vpop.xlane.xlu0 %812
    %v814 = vmul.f32 %v768, %v257
    %v815 = vmul.f32 %v771, %v257
    %v816 = vmul.f32 %v774, %v257
    %v817 = vmul.f32 %v777, %v257
    %v818 = vmul.f32 %v780, %v257
    %v819 = vmul.f32 %v783, %v257
    %v820 = vmul.f32 %v786, %v257
    %v821 = vmul.f32 %v789, %v257
    %v822 = vmul.f32 %v792, %v257
    %v823 = vmul.f32 %v795, %v257
    %v824 = vmul.f32 %v798, %v257
    %v825 = vmul.f32 %v801, %v257
    %v826 = vmul.f32 %v804, %v257
    %v827 = vmul.f32 %v807, %v257
    %v828 = vmul.f32 %v810, %v257
    %v829 = vmul.f32 %v813, %v257
    %v830 = vsub.f32 %v750, %v814
    %v831 = vsub.f32 %v751, %v815
    %v832 = vsub.f32 %v752, %v816
    %v833 = vsub.f32 %v753, %v817
    %v834 = vsub.f32 %v754, %v818
    %v835 = vsub.f32 %v755, %v819
    %v836 = vsub.f32 %v756, %v820
    %v837 = vsub.f32 %v757, %v821
    %v838 = vsub.f32 %v758, %v822
    %v839 = vsub.f32 %v759, %v823
    %v840 = vsub.f32 %v760, %v824
    %v841 = vsub.f32 %v761, %v825
    %v842 = vsub.f32 %v762, %v826
    %v843 = vsub.f32 %v763, %v827
    %v844 = vsub.f32 %v764, %v828
    %v845 = vsub.f32 %v765, %v829
    %v846 = vmul.f32 %v830, %v830
    %v847 = vmul.f32 %v831, %v831
    %v848 = vmul.f32 %v832, %v832
    %v849 = vmul.f32 %v833, %v833
    %v850 = vmul.f32 %v834, %v834
    %v851 = vmul.f32 %v835, %v835
    %v852 = vmul.f32 %v836, %v836
    %v853 = vmul.f32 %v837, %v837
    %v854 = vmul.f32 %v838, %v838
    %v855 = vmul.f32 %v839, %v839
    %v856 = vmul.f32 %v840, %v840
    %v857 = vmul.f32 %v841, %v841
    %v858 = vmul.f32 %v842, %v842
    %v859 = vmul.f32 %v843, %v843
    %v860 = vmul.f32 %v844, %v844
    %v861 = vmul.f32 %v845, %v845
    %v862 = vsel %vm208, %v846, 0.0
    %863 = vadd.xlane.f32.xlu0 %v862
    %v864 = vpop.xlane.xlu0 %863
    %v865 = vsel %vm208, %v847, 0.0
    %866 = vadd.xlane.f32.xlu0 %v865
    %v867 = vpop.xlane.xlu0 %866
    %v868 = vsel %vm208, %v848, 0.0
    %869 = vadd.xlane.f32.xlu0 %v868
    %v870 = vpop.xlane.xlu0 %869
    %v871 = vsel %vm208, %v849, 0.0
    %872 = vadd.xlane.f32.xlu0 %v871
    %v873 = vpop.xlane.xlu0 %872
    %v874 = vsel %vm208, %v850, 0.0
    %875 = vadd.xlane.f32.xlu0 %v874
    %v876 = vpop.xlane.xlu0 %875
    %v877 = vsel %vm208, %v851, 0.0
    %878 = vadd.xlane.f32.xlu0 %v877
    %v879 = vpop.xlane.xlu0 %878
    %v880 = vsel %vm208, %v852, 0.0
    %881 = vadd.xlane.f32.xlu0 %v880
    %v882 = vpop.xlane.xlu0 %881
    %v883 = vsel %vm208, %v853, 0.0
    %884 = vadd.xlane.f32.xlu0 %v883
    %v885 = vpop.xlane.xlu0 %884
    %v886 = vsel %vm208, %v854, 0.0
    %887 = vadd.xlane.f32.xlu0 %v886
    %v888 = vpop.xlane.xlu0 %887
    %v889 = vsel %vm208, %v855, 0.0
    %890 = vadd.xlane.f32.xlu0 %v889
    %v891 = vpop.xlane.xlu0 %890
    %v892 = vsel %vm208, %v856, 0.0
    %893 = vadd.xlane.f32.xlu0 %v892
    %v894 = vpop.xlane.xlu0 %893
    %v895 = vsel %vm208, %v857, 0.0
    %896 = vadd.xlane.f32.xlu0 %v895
    %v897 = vpop.xlane.xlu0 %896
    %v898 = vsel %vm208, %v858, 0.0
    %899 = vadd.xlane.f32.xlu0 %v898
    %v900 = vpop.xlane.xlu0 %899
    %v901 = vsel %vm208, %v859, 0.0
    %902 = vadd.xlane.f32.xlu0 %v901
    %v903 = vpop.xlane.xlu0 %902
    %v904 = vsel %vm208, %v860, 0.0
    %905 = vadd.xlane.f32.xlu0 %v904
    %v906 = vpop.xlane.xlu0 %905
    %v907 = vsel %vm208, %v861, 0.0
    %908 = vadd.xlane.f32.xlu0 %v907
    %v909 = vpop.xlane.xlu0 %908
    %v910 = vmul.f32 %v864, %v257
    %v911 = vmul.f32 %v867, %v257
    %v912 = vmul.f32 %v870, %v257
    %v913 = vmul.f32 %v873, %v257
    %v914 = vmul.f32 %v876, %v257
    %v915 = vmul.f32 %v879, %v257
    %v916 = vmul.f32 %v882, %v257
    %v917 = vmul.f32 %v885, %v257
    %v918 = vmul.f32 %v888, %v257
    %v919 = vmul.f32 %v891, %v257
    %v920 = vmul.f32 %v894, %v257
    %v921 = vmul.f32 %v897, %v257
    %v922 = vmul.f32 %v900, %v257
    %v923 = vmul.f32 %v903, %v257
    %v924 = vmul.f32 %v906, %v257
    %v925 = vmul.f32 %v909, %v257
    %v926 = vadd.f32 %v910, 1e-05
    %v927 = vadd.f32 %v911, 1e-05
    %v928 = vadd.f32 %v912, 1e-05
    %v929 = vadd.f32 %v913, 1e-05
    %v930 = vadd.f32 %v914, 1e-05
    %v931 = vadd.f32 %v915, 1e-05
    %v932 = vadd.f32 %v916, 1e-05
    %v933 = vadd.f32 %v917, 1e-05
    %v934 = vadd.f32 %v918, 1e-05
    %v935 = vadd.f32 %v919, 1e-05
    %v936 = vadd.f32 %v920, 1e-05
    %v937 = vadd.f32 %v921, 1e-05
    %v938 = vadd.f32 %v922, 1e-05
    %v939 = vadd.f32 %v923, 1e-05
    %v940 = vadd.f32 %v924, 1e-05
    %v941 = vadd.f32 %v925, 1e-05
    %v942 = vrsqrt.pop %v926
    %v943 = vrsqrt.pop %v927
    %v944 = vrsqrt.pop %v928
    %v945 = vrsqrt.pop %v929
    %v946 = vrsqrt.pop %v930
    %v947 = vrsqrt.pop %v931
    %v948 = vrsqrt.pop %v932
    %v949 = vrsqrt.pop %v933
    %v950 = vrsqrt.pop %v934
    %v951 = vrsqrt.pop %v935
    %v952 = vrsqrt.pop %v936
    %v953 = vrsqrt.pop %v937
    %v954 = vrsqrt.pop %v938
    %v955 = vrsqrt.pop %v939
    %v956 = vrsqrt.pop %v940
    %v957 = vrsqrt.pop %v941
    %v958 = vmul.f32 %v830, %v942
    %v959 = vmul.f32 %v831, %v943
    %v960 = vmul.f32 %v832, %v944
    %v961 = vmul.f32 %v833, %v945
    %v962 = vmul.f32 %v834, %v946
    %v963 = vmul.f32 %v835, %v947
    %v964 = vmul.f32 %v836, %v948
    %v965 = vmul.f32 %v837, %v949
    %v966 = vmul.f32 %v838, %v950
    %v967 = vmul.f32 %v839, %v951
    %v968 = vmul.f32 %v840, %v952
    %v969 = vmul.f32 %v841, %v953
    %v970 = vmul.f32 %v842, %v954
    %v971 = vmul.f32 %v843, %v955
    %v972 = vmul.f32 %v844, %v956
    %v973 = vmul.f32 %v845, %v957
    %v974 = vlaneseq
    %v975 = vshrl.u32 %v974, 7
    %v976 = vsub.s32 4, %v975
    %v977 = vrot.slane %v73, %v976
    %v978 = vmul.f32 %v958, %v977
    %v979 = vmul.f32 %v959, %v977
    %v980 = vmul.f32 %v960, %v977
    %v981 = vmul.f32 %v961, %v977
    %v982 = vmul.f32 %v962, %v977
    %v983 = vmul.f32 %v963, %v977
    %v984 = vmul.f32 %v964, %v977
    %v985 = vmul.f32 %v965, %v977
    %v986 = vmul.f32 %v966, %v977
    %v987 = vmul.f32 %v967, %v977
    %v988 = vmul.f32 %v968, %v977
    %v989 = vmul.f32 %v969, %v977
    %v990 = vmul.f32 %v970, %v977
    %v991 = vmul.f32 %v971, %v977
    %v992 = vmul.f32 %v972, %v977
    %v993 = vmul.f32 %v973, %v977
    %v994 = vlaneseq
    %v995 = vshrl.u32 %v994, 7
    %v996 = vsub.s32 5, %v995
    %v997 = vrot.slane %v73, %v996
    %v998 = vadd.f32 %v978, %v997
    %v999 = vadd.f32 %v979, %v997
    %v1000 = vadd.f32 %v980, %v997
    %v1001 = vadd.f32 %v981, %v997
    %v1002 = vadd.f32 %v982, %v997
    %v1003 = vadd.f32 %v983, %v997
    %v1004 = vadd.f32 %v984, %v997
    %v1005 = vadd.f32 %v985, %v997
    %v1006 = vadd.f32 %v986, %v997
    %v1007 = vadd.f32 %v987, %v997
    %v1008 = vadd.f32 %v988, %v997
    %v1009 = vadd.f32 %v989, %v997
    %v1010 = vadd.f32 %v990, %v997
    %v1011 = vadd.f32 %v991, %v997
    %v1012 = vadd.f32 %v992, %v997
    %v1013 = vadd.f32 %v993, %v997
    %v1014 = vmax.f32 %v998, 0.0
    %v1015 = vmax.f32 %v999, 0.0
    %v1016 = vmax.f32 %v1000, 0.0
    %v1017 = vmax.f32 %v1001, 0.0
    %v1018 = vmax.f32 %v1002, 0.0
    %v1019 = vmax.f32 %v1003, 0.0
    %v1020 = vmax.f32 %v1004, 0.0
    %v1021 = vmax.f32 %v1005, 0.0
    %v1022 = vmax.f32 %v1006, 0.0
    %v1023 = vmax.f32 %v1007, 0.0
    %v1024 = vmax.f32 %v1008, 0.0
    %v1025 = vmax.f32 %v1009, 0.0
    %v1026 = vmax.f32 %v1010, 0.0
    %v1027 = vmax.f32 %v1011, 0.0
    %v1028 = vmax.f32 %v1012, 0.0
    %v1029 = vmax.f32 %v1013, 0.0
    %1031 = vset.pattern.permute.xlu0 0
    %1032 = vperm.xlu0 %1031, %v73
    %v1033 = vpop.permute.xlu0 %1032
    %v1034 = vrot.slane %v73, 6
    %v1035 = vrot.slane %v1033, 7
    %v1037 = vsel %vm208, %v1034, 0
    %v1040 = vsel %vm208, %v1014, 0
    %v1043 = vsel %vm208, %v1015, 0
    %v1046 = vsel %vm208, %v1016, 0
    %v1049 = vsel %vm208, %v1017, 0
    %v1052 = vsel %vm208, %v1018, 0
    %v1055 = vsel %vm208, %v1019, 0
    %v1058 = vsel %vm208, %v1020, 0
    %v1061 = vsel %vm208, %v1021, 0
    %v1064 = vsel %vm208, %v1022, 0
    %v1067 = vsel %vm208, %v1023, 0
    %v1070 = vsel %vm208, %v1024, 0
    %v1073 = vsel %vm208, %v1025, 0
    %v1076 = vsel %vm208, %v1026, 0
    %v1079 = vsel %vm208, %v1027, 0
    %v1082 = vsel %vm208, %v1028, 0
    %v1085 = vsel %vm208, %v1029, 0
    %1087 = vmatprep.subr.mxu0 0.0
    %1088 = vmatpush1.xpose.msra.mxu0 %v1040
    %1089 = vmatprep.subr.mxu0 0.0
    %1090 = vmatpush1.xpose.msra.mxu0 %v1043
    %1091 = vmatprep.subr.mxu0 0.0
    %1092 = vmatpush1.xpose.msra.mxu0 %v1046
    %1093 = vmatprep.subr.mxu0 0.0
    %1094 = vmatpush1.xpose.msra.mxu0 %v1049
    %1095 = vmatprep.subr.mxu0 0.0
    %1096 = vmatpush1.xpose.msra.mxu0 %v1052
    %1097 = vmatprep.subr.mxu0 0.0
    %1098 = vmatpush1.xpose.msra.mxu0 %v1055
    %1099 = vmatprep.subr.mxu0 0.0
    %1100 = vmatpush1.xpose.msra.mxu0 %v1058
    %1101 = vmatprep.subr.mxu0 0.0
    %1102 = vmatpush1.xpose.msra.mxu0 %v1061
    %1103 = vmatprep.subr.mxu0 0.0
    %1104 = vmatpush1.xpose.msra.mxu0 %v1064
    %1105 = vmatprep.subr.mxu0 0.0
    %1106 = vmatpush1.xpose.msra.mxu0 %v1067
    %1107 = vmatprep.subr.mxu0 0.0
    %1108 = vmatpush1.xpose.msra.mxu0 %v1070
    %1109 = vmatprep.subr.mxu0 0.0
    %1110 = vmatpush1.xpose.msra.mxu0 %v1073
    %1111 = vmatprep.subr.mxu0 0.0
    %1112 = vmatpush1.xpose.msra.mxu0 %v1076
    %1113 = vmatprep.subr.mxu0 0.0
    %1114 = vmatpush1.xpose.msra.mxu0 %v1079
    %1115 = vmatprep.subr.mxu0 0.0
    %1116 = vmatpush1.xpose.msra.mxu0 %v1082
    %1117 = vmatprep.subr.mxu0 0.0
    %1118 = vmatpush1.xpose.msra.mxu0 %v1085
    %1119 = vmatprep.subr.mxu0 0.0
    %1120 = vmatpush1.xpose.msra.mxu0 0.0
    %1121 = vmatprep.subr.mxu0 0.0
    %1122 = vmatpush1.xpose.msra.mxu0 0.0
    %1123 = vmatprep.subr.mxu0 0.0
    %1124 = vmatpush1.xpose.msra.mxu0 0.0
    %1125 = vmatprep.subr.mxu0 0.0
    %1126 = vmatpush1.xpose.msra.mxu0 0.0
    %1127 = vmatprep.subr.mxu0 0.0
    %1128 = vmatpush1.xpose.msra.mxu0 0.0
    %1129 = vmatprep.subr.mxu0 0.0
    %1130 = vmatpush1.xpose.msra.mxu0 0.0
    %1131 = vmatprep.subr.mxu0 0.0
    %1132 = vmatpush1.xpose.msra.mxu0 0.0
    %1133 = vmatprep.subr.mxu0 0.0
    %1134 = vmatpush1.xpose.msra.mxu0 0.0
    %1135 = vmatprep.subr.mxu0 0.0
    %1136 = vmatpush1.xpose.msra.mxu0 0.0
    %1137 = vmatprep.subr.mxu0 0.0
    %1138 = vmatpush1.xpose.msra.mxu0 0.0
    %1139 = vmatprep.subr.mxu0 0.0
    %1140 = vmatpush1.xpose.msra.mxu0 0.0
    %1141 = vmatprep.subr.mxu0 0.0
    %1142 = vmatpush1.xpose.msra.mxu0 0.0
    %1143 = vmatprep.subr.mxu0 0.0
    %1144 = vmatpush1.xpose.msra.mxu0 0.0
    %1145 = vmatprep.subr.mxu0 0.0
    %1146 = vmatpush1.xpose.msra.mxu0 0.0
    %1147 = vmatprep.subr.mxu0 0.0
    %1148 = vmatpush1.xpose.msra.mxu0 0.0
    %1149 = vmatprep.subr.mxu0 0.0
    %1150 = vmatpush1.xpose.msra.mxu0 0.0
    %1151 = vmatprep.mubr.f32.mxu0 0.0
    %1152 = vmatmul.mubr.f32.gmra.mrb[0].mxu0 %v1037
    %v1153 = vpop.f32.mrb[0].mxu0
    %v1154 = vadd.f32 %v1035, %v1153
    %v1155 = vpop.f32.mrb[0].mxu0
    %1156 = vdwg.mxu0
    %1157 = vst [vmem:[#allocation2] sm:$0x1] %v1154
    // Predicated region
    $region26: #{tpu_custom_call.1} parent=1 // pred_check
      _
    $region27: #{tpu_custom_call.1} parent=1 // pred_check_branch
      %1159 = sbr.rel (0) target = $region29
    $region28: #{tpu_custom_call.1} parent=1 // pred_region
      %s1161 = ssub.s32 16, 16
      %1162 = vsyncadd [#allocation3], %s1161
      %s1164 = sshll.u32 [#allocation2], 4
      %s1165 = int_to_ptr.vmem [resolvable:$true] %s1164
      %1167 = dma.vmem_to_hbm [thread:$0]  %s1165, 16, %s6, [#allocation3]
    $region29: #{tpu_custom_call.1} parent=1 // pred_fallthru
      _
    // Predicated region
    $region30: #{tpu_custom_call.1} parent=1 // pred_check
      _
    $region31: #{tpu_custom_call.1} parent=1 // pred_check_branch
      %1169 = sbr.rel (0) target = $region33
    $region32: #{tpu_custom_call.1} parent=1 // pred_region
      %1170 = dma.done [#allocation3], 16
    $region33: #{tpu_custom_call.1} parent=1 // pred_fallthru
      _
    %1171 = vsyncpa [#allocation3], 1

</llo_original>
